<compile_context>
chip_gen: v7x
topology: tpu7x:2x2x1
jax: 0.10.0
libtpu: 0.0.40
codegen_flags: <defaults>
</compile_context>

<pallas_src>
import functools

import jax
import jax.numpy as jnp
from jax.experimental import pallas as pl
from jax.experimental.pallas import tpu as pltpu

EPS = 1e-5  # InstanceNorm3d default eps


def resblock_kernel(x_ref, r_ref, o_ref, *, nb, d, channels):
    # x_ref : (nb*d, HWC)     f32   lane-dense slab (free reshape of NDHWC)
    # r_ref : (3*HWC, HWC)    bf16  packed block-banded conv weights
    # o_ref : (nb*d, HWC)     f32   output
    M, HWC = x_ref.shape
    C = channels
    HW = HWC // C

    x = x_ref[...]                                            # (M, HWC) f32

    # ---- fused im2col slab: columns = [tap kd=0 | kd=1 | kd=2] per instance.
    # The D halo is two zero rows folded in here; the H/W zero padding lives
    # in the packed banded weight matrix.  One f32->bf16 cast of the slab.
    zrow = jnp.zeros((1, HWC), jnp.float32)
    rows = []
    for n in range(nb):
        xn = x[n * d:(n + 1) * d]                             # (d, HWC)
        tap0 = jnp.concatenate([zrow, xn[:d - 1]], axis=0)    # xpad[d + 0]
        tap2 = jnp.concatenate([xn[1:], zrow], axis=0)        # xpad[d + 2]
        rows.append(jnp.concatenate([tap0, xn, tap2], axis=1))
    lhs = jnp.concatenate(rows, axis=0).astype(jnp.bfloat16)  # (M, 3*HWC)

    # ---- single MXU matmul, K = 3*HWC, f32 accumulation.
    acc = jnp.dot(lhs, r_ref[...],
                  preferred_element_type=jnp.float32)          # (M, HWC) f32

    # ---- InstanceNorm statistics, fully lane-dense (no (D*HW, C) relayout).
    stat_rows = []
    for n in range(nb):
        an = acc[n * d:(n + 1) * d]
        stat_rows.append(jnp.sum(an, axis=0, keepdims=True))        # sum over D
        stat_rows.append(jnp.sum(an * an, axis=0, keepdims=True))   # sum of sq
    stats = jnp.concatenate(stat_rows, axis=0)                 # (2*nb, HWC) f32

    if HW & (HW - 1) == 0:
        # Fold the HW lane groups (stride C) by recursive-doubling lane rolls:
        # every lane ends up holding its channel's full sum, already broadcast
        # in the lane-dense layout (XLU slot; no broadcast_in_dim / reshape).
        shift = C
        while shift < HWC:
            stats = stats + pltpu.roll(stats, shift=shift, axis=1)
            shift *= 2
    else:
        # Fallback for non-power-of-two HW: small relayout reduce + broadcast.
        st = jnp.sum(stats.reshape(2 * nb, HW, C), axis=1, keepdims=True)
        stats = jnp.broadcast_to(st, (2 * nb, HW, C)).reshape(2 * nb, HWC)

    inv_n = 1.0 / float(d * HW)

    # ---- normalize / ReLU / residual: pure VPU, unmasked 256-lane stores.
    for n in range(nb):
        mean_f = stats[2 * n:2 * n + 1] * inv_n                # (1, HWC)
        msq_f = stats[2 * n + 1:2 * n + 2] * inv_n
        rstd_f = jax.lax.rsqrt(msq_f - mean_f * mean_f + EPS)  # (1, HWC)
        an = acc[n * d:(n + 1) * d]
        xn = x[n * d:(n + 1) * d]
        yn = xn + jnp.maximum((an - mean_f) * rstd_f, 0.0)
        o_ref[pl.ds(n * d, d), :] = yn.astype(o_ref.dtype)


def build_packed_weights(w27, H, W, C, dtype=jnp.bfloat16):
    """Fold the (kh, kw, cin)->cout contraction of a 3x3x3 conv (padding=1)
    into one block-banded matrix R of shape (3*H*W*C, H*W*C) such that
        y[d, :] = concat(xpad[d+0], xpad[d+1], xpad[d+2]) @ R
    where xpad is the D-padded, (H*W*C)-flattened volume.  The H/W zero
    padding is encoded by the band mask.  Done once per weight set."""
    w5 = w27.reshape(3, 3, 3, C, C).astype(jnp.float32)   # (kd, kh, kw, ci, co)

    hi = jnp.arange(H)[:, None]
    ho = jnp.arange(H)[None, :]
    kh = hi - ho + 1                                      # valid taps: 0..2
    mh = (kh >= 0) & (kh <= 2)
    wi = jnp.arange(W)[:, None]
    wo = jnp.arange(W)[None, :]
    kw = wi - wo + 1
    mw = (kw >= 0) & (kw <= 2)

    g = w5[:, jnp.clip(kh, 0, 2)]                         # (3, H, H, 3, C, C)
    g = g[:, :, :, jnp.clip(kw, 0, 2)]                    # (3, H, H, W, W, C, C)
    mask = (mh[:, :, None, None] & mw[None, None, :, :]).astype(jnp.float32)
    g = g * mask[None, :, :, :, :, None, None]
    # (kd, h_in, w_in, c_in, h_out, w_out, c_out) -> (3*HWC_in, HWC_out)
    g = jnp.transpose(g, (0, 1, 3, 5, 2, 4, 6))
    return g.reshape(3 * H * W * C, H * W * C).astype(dtype)


def resblock_forward_ndhwc(x_ndhwc, w27):
    """x_ndhwc: (N, D, H, W, C) float32. Returns same shape/dtype."""
    N, D, H, W, C = x_ndhwc.shape
    HWC = H * W * C
    x2d = x_ndhwc.astype(jnp.float32).reshape(N * D, HWC)  # free reshape of NDHWC
    r = build_packed_weights(w27, H, W, C)

    nb = N                       # instances per grid block: whole batch, 1 step
    assert N % nb == 0
    grid = (N // nb,)

    flops = 2 * (N * D) * (3 * HWC) * HWC
    bytes_accessed = 2 * N * D * HWC * 4 + r.size * 2

    kernel = functools.partial(resblock_kernel, nb=nb, d=D, channels=C)
    y2d = pl.pallas_call(
        kernel,
        out_shape=jax.ShapeDtypeStruct((N * D, HWC), jnp.float32),
        grid=grid,
        in_specs=[
            pl.BlockSpec((nb * D, HWC), lambda b: (b, 0)),       # activations
            pl.BlockSpec((3 * HWC, HWC), lambda b: (0, 0)),      # packed weights
        ],
        out_specs=pl.BlockSpec((nb * D, HWC), lambda b: (b, 0)),
        compiler_params=pltpu.CompilerParams(
            dimension_semantics=("parallel",),
            vmem_limit_bytes=32 * 1024 * 1024),
        cost_estimate=pl.CostEstimate(flops=flops,
                                      transcendentals=N * HWC,
                                      bytes_accessed=bytes_accessed),
    )(x2d, r)
    return y2d.reshape(N, D, H, W, C)


def resblock_forward_ncdhw(x_ncdhw, w27, bias=None):
    """PyTorch-facing wrapper: NCDHW in, NCDHW out.

    `bias` is accepted for interface parity with nn.Conv3d but is unused:
    InstanceNorm3d(affine=False) subtracts the per-channel mean, so a
    per-channel conv bias cancels exactly in this forward pass."""
    del bias
    x_ndhwc = jnp.transpose(x_ncdhw, (0, 2, 3, 4, 1))
    y = resblock_forward_ndhwc(x_ndhwc, w27)
    return jnp.transpose(y, (0, 4, 1, 2, 3))


def ref_forward_ndhwc(x, w27, bias):
    """Pure-JAX f32 reference (same math as the PyTorch module, incl. bias)."""
    C = x.shape[-1]
    w = w27.reshape(3, 3, 3, C, C)
    y = jax.lax.conv_general_dilated(
        x, w, window_strides=(1, 1, 1),
        padding=((1, 1), (1, 1), (1, 1)),
        dimension_numbers=("NDHWC", "DHWIO", "NDHWC"),
        precision=jax.lax.Precision.HIGHEST)
    y = y + bias
    mean = jnp.mean(y, axis=(1, 2, 3), keepdims=True)
    var = jnp.var(y, axis=(1, 2, 3), keepdims=True)
    y = (y - mean) * jax.lax.rsqrt(var + EPS)
    return x + jnp.maximum(y, 0.0)


if __name__ == "__main__":
    # Small shapes: batch=2, channel=4, D=H=W=8 (PyTorch input is NCDHW).
    N, C, D, H, W = 2, 4, 8, 8, 8

    key = jax.random.PRNGKey(0)
    kx, kw_, kb = jax.random.split(key, 3)

    # Deterministic parameter init (PyTorch-like uniform bounds, fan_in = C*27).
    fan_in = C * 3 * 3 * 3
    bound = 1.0 / (fan_in ** 0.5)
    w27 = jax.random.uniform(kw_, (27, C, C), jnp.float32, -bound, bound)
    bias = jax.random.uniform(kb, (C,), jnp.float32, -bound, bound)

    x_ncdhw = jax.random.normal(kx, (N, C, D, H, W), jnp.float32)

    out = resblock_forward_ncdhw(x_ncdhw, w27, bias)
    out = jax.block_until_ready(out)

    # Correctness check vs the f32 reference. Tolerance is sized for bf16 MXU
    # operands (f32 accumulation); all other math is f32.
    x_ndhwc = jnp.transpose(x_ncdhw, (0, 2, 3, 4, 1))
    ref = jnp.transpose(ref_forward_ndhwc(x_ndhwc, w27, bias), (0, 4, 1, 2, 3))
    assert out.shape == x_ncdhw.shape
    assert jnp.allclose(out, ref, atol=5e-2, rtol=5e-2)

    print("KERNEL_OK")
</pallas_src>

<mosaic_0001>
module attributes {stable_mosaic.version = 11 : i64} {
  func.func @resblock_kernel(%arg0: i32, %arg1: memref<16x256xf32, #tpu.memory_space<vmem>>, %arg2: memref<768x256xbf16, #tpu.memory_space<vmem>>, %arg3: memref<16x256xf32, #tpu.memory_space<vmem>>) attributes {dimension_semantics = [#tpu.dimension_semantics<parallel>], iteration_bounds = array<i64: 1>, scalar_prefetch = 0 : i64, scratch_operands = 0 : i64, tpu.core_type = #tpu.core_type<tc>, window_params = [{transform_indices = @transform_0, window_bounds = array<i64: 16, 256>}, {pipeline_mode = #tpu.pipeline_mode<synchronous>, transform_indices = @transform_1, window_bounds = array<i64: 768, 256>}, {transform_indices = @transform_2, window_bounds = array<i64: 16, 256>}]} {
    %c0 = arith.constant 0 : index
    %c0_0 = arith.constant 0 : index
    %0 = vector.load %arg1[%c0, %c0_0] : memref<16x256xf32, #tpu.memory_space<vmem>>, vector<16x256xf32>
    %cst = arith.constant 0.000000e+00 : f32
    %1 = vector.broadcast %cst : f32 to vector<1x256xf32>
    %2 = vector.extract_strided_slice %0 {offsets = [0, 0], sizes = [8, 256], strides = [1, 1]} : vector<16x256xf32> to vector<8x256xf32>
    %3 = vector.extract_strided_slice %2 {offsets = [0, 0], sizes = [7, 256], strides = [1, 1]} : vector<8x256xf32> to vector<7x256xf32>
    %4 = tpu.concatenate %1, %3 in 0 : vector<1x256xf32>, vector<7x256xf32> -> vector<8x256xf32>
    %5 = vector.extract_strided_slice %2 {offsets = [1, 0], sizes = [7, 256], strides = [1, 1]} : vector<8x256xf32> to vector<7x256xf32>
    %6 = tpu.concatenate %5, %1 in 0 : vector<7x256xf32>, vector<1x256xf32> -> vector<8x256xf32>
    %7 = tpu.concatenate %4, %2, %6 in 1 : vector<8x256xf32>, vector<8x256xf32>, vector<8x256xf32> -> vector<8x768xf32>
    %8 = vector.extract_strided_slice %0 {offsets = [8, 0], sizes = [8, 256], strides = [1, 1]} : vector<16x256xf32> to vector<8x256xf32>
    %9 = vector.extract_strided_slice %8 {offsets = [0, 0], sizes = [7, 256], strides = [1, 1]} : vector<8x256xf32> to vector<7x256xf32>
    %10 = tpu.concatenate %1, %9 in 0 : vector<1x256xf32>, vector<7x256xf32> -> vector<8x256xf32>
    %11 = vector.extract_strided_slice %8 {offsets = [1, 0], sizes = [7, 256], strides = [1, 1]} : vector<8x256xf32> to vector<7x256xf32>
    %12 = tpu.concatenate %11, %1 in 0 : vector<7x256xf32>, vector<1x256xf32> -> vector<8x256xf32>
    %13 = tpu.concatenate %10, %8, %12 in 1 : vector<8x256xf32>, vector<8x256xf32>, vector<8x256xf32> -> vector<8x768xf32>
    %14 = tpu.concatenate %7, %13 in 0 : vector<8x768xf32>, vector<8x768xf32> -> vector<16x768xf32>
    %15 = arith.truncf %14 : vector<16x768xf32> to vector<16x768xbf16>
    %c0_1 = arith.constant 0 : index
    %c0_2 = arith.constant 0 : index
    %16 = vector.load %arg2[%c0_1, %c0_2] : memref<768x256xbf16, #tpu.memory_space<vmem>>, vector<768x256xbf16>
    %cst_3 = arith.constant dense<0.000000e+00> : vector<16x256xf32>
    %17 = tpu.matmul %15, %16, %cst_3 {dimension_numbers = #tpu.dot_dimension_numbers<[1], [0], [0], [1], [0, 0, 1, 1], [], []>} : vector<16x768xbf16>, vector<768x256xbf16>, vector<16x256xf32> -> vector<16x256xf32>
    %18 = vector.extract_strided_slice %17 {offsets = [0, 0], sizes = [8, 256], strides = [1, 1]} : vector<16x256xf32> to vector<8x256xf32>
    %cst_4 = arith.constant dense<0.000000e+00> : vector<256xf32>
    %19 = vector.multi_reduction <add>, %18, %cst_4 [0] : vector<8x256xf32> to vector<256xf32>
    %20 = vector.shape_cast %19 : vector<256xf32> to vector<1x256xf32>
    %21 = arith.mulf %18, %18 : vector<8x256xf32>
    %cst_5 = arith.constant dense<0.000000e+00> : vector<256xf32>
    %22 = vector.multi_reduction <add>, %21, %cst_5 [0] : vector<8x256xf32> to vector<256xf32>
    %23 = vector.shape_cast %22 : vector<256xf32> to vector<1x256xf32>
    %24 = vector.extract_strided_slice %17 {offsets = [8, 0], sizes = [8, 256], strides = [1, 1]} : vector<16x256xf32> to vector<8x256xf32>
    %cst_6 = arith.constant dense<0.000000e+00> : vector<256xf32>
    %25 = vector.multi_reduction <add>, %24, %cst_6 [0] : vector<8x256xf32> to vector<256xf32>
    %26 = vector.shape_cast %25 : vector<256xf32> to vector<1x256xf32>
    %27 = arith.mulf %24, %24 : vector<8x256xf32>
    %cst_7 = arith.constant dense<0.000000e+00> : vector<256xf32>
    %28 = vector.multi_reduction <add>, %27, %cst_7 [0] : vector<8x256xf32> to vector<256xf32>
    %29 = vector.shape_cast %28 : vector<256xf32> to vector<1x256xf32>
    %30 = tpu.concatenate %20, %23, %26, %29 in 0 : vector<1x256xf32>, vector<1x256xf32>, vector<1x256xf32>, vector<1x256xf32> -> vector<4x256xf32>
    %c4_i32 = arith.constant 4 : i32
    %31 = tpu.dynamic_rotate %30 by %c4_i32 dim 1 : vector<4x256xf32>, i32 -> vector<4x256xf32>
    %32 = arith.addf %30, %31 : vector<4x256xf32>
    %c8_i32 = arith.constant 8 : i32
    %33 = tpu.dynamic_rotate %32 by %c8_i32 dim 1 : vector<4x256xf32>, i32 -> vector<4x256xf32>
    %34 = arith.addf %32, %33 : vector<4x256xf32>
    %c16_i32 = arith.constant 16 : i32
    %35 = tpu.dynamic_rotate %34 by %c16_i32 dim 1 : vector<4x256xf32>, i32 -> vector<4x256xf32>
    %36 = arith.addf %34, %35 : vector<4x256xf32>
    %c32_i32 = arith.constant 32 : i32
    %37 = tpu.dynamic_rotate %36 by %c32_i32 dim 1 : vector<4x256xf32>, i32 -> vector<4x256xf32>
    %38 = arith.addf %36, %37 : vector<4x256xf32>
    %c64_i32 = arith.constant 64 : i32
    %39 = tpu.dynamic_rotate %38 by %c64_i32 dim 1 : vector<4x256xf32>, i32 -> vector<4x256xf32>
    %40 = arith.addf %38, %39 : vector<4x256xf32>
    %c128_i32 = arith.constant 128 : i32
    %41 = tpu.dynamic_rotate %40 by %c128_i32 dim 1 : vector<4x256xf32>, i32 -> vector<4x256xf32>
    %42 = arith.addf %40, %41 : vector<4x256xf32>
    %43 = vector.extract_strided_slice %42 {offsets = [0, 0], sizes = [1, 256], strides = [1, 1]} : vector<4x256xf32> to vector<1x256xf32>
    %cst_8 = arith.constant 0.001953125 : f32
    %44 = vector.broadcast %cst_8 : f32 to vector<1x256xf32>
    %45 = arith.mulf %43, %44 : vector<1x256xf32>
    %46 = vector.extract_strided_slice %42 {offsets = [1, 0], sizes = [1, 256], strides = [1, 1]} : vector<4x256xf32> to vector<1x256xf32>
    %cst_9 = arith.constant 0.001953125 : f32
    %47 = vector.broadcast %cst_9 : f32 to vector<1x256xf32>
    %48 = arith.mulf %46, %47 : vector<1x256xf32>
    %49 = arith.mulf %45, %45 : vector<1x256xf32>
    %50 = arith.subf %48, %49 : vector<1x256xf32>
    %cst_10 = arith.constant 9.99999974E-6 : f32
    %51 = vector.broadcast %cst_10 : f32 to vector<1x256xf32>
    %52 = arith.addf %50, %51 : vector<1x256xf32>
    %53 = math.rsqrt %52 : vector<1x256xf32>
    %54 = vector.extract_strided_slice %17 {offsets = [0, 0], sizes = [8, 256], strides = [1, 1]} : vector<16x256xf32> to vector<8x256xf32>
    %55 = vector.extract_strided_slice %0 {offsets = [0, 0], sizes = [8, 256], strides = [1, 1]} : vector<16x256xf32> to vector<8x256xf32>
    %56 = vector.broadcast %45 : vector<1x256xf32> to vector<8x256xf32>
    %57 = arith.subf %54, %56 : vector<8x256xf32>
    %58 = vector.broadcast %53 : vector<1x256xf32> to vector<8x256xf32>
    %59 = arith.mulf %57, %58 : vector<8x256xf32>
    %cst_11 = arith.constant 0.000000e+00 : f32
    %60 = vector.broadcast %cst_11 : f32 to vector<8x256xf32>
    %61 = arith.maximumf %59, %60 : vector<8x256xf32>
    %62 = arith.addf %55, %61 : vector<8x256xf32>
    %c0_12 = arith.constant 0 : index
    %c0_13 = arith.constant 0 : index
    %63 = vector.load %arg3[%c0_12, %c0_13] : memref<16x256xf32, #tpu.memory_space<vmem>>, vector<8x256xf32>
    tpu.vector_store %arg3[%c0_12, %c0_13], %62 {strides = array<i32>} : memref<16x256xf32, #tpu.memory_space<vmem>>, vector<8x256xf32>,
    %64 = vector.extract_strided_slice %42 {offsets = [2, 0], sizes = [1, 256], strides = [1, 1]} : vector<4x256xf32> to vector<1x256xf32>
    %cst_14 = arith.constant 0.001953125 : f32
    %65 = vector.broadcast %cst_14 : f32 to vector<1x256xf32>
    %66 = arith.mulf %64, %65 : vector<1x256xf32>
    %67 = vector.extract_strided_slice %42 {offsets = [3, 0], sizes = [1, 256], strides = [1, 1]} : vector<4x256xf32> to vector<1x256xf32>
    %cst_15 = arith.constant 0.001953125 : f32
    %68 = vector.broadcast %cst_15 : f32 to vector<1x256xf32>
    %69 = arith.mulf %67, %68 : vector<1x256xf32>
    %70 = arith.mulf %66, %66 : vector<1x256xf32>
    %71 = arith.subf %69, %70 : vector<1x256xf32>
    %cst_16 = arith.constant 9.99999974E-6 : f32
    %72 = vector.broadcast %cst_16 : f32 to vector<1x256xf32>
    %73 = arith.addf %71, %72 : vector<1x256xf32>
    %74 = math.rsqrt %73 : vector<1x256xf32>
    %75 = vector.extract_strided_slice %17 {offsets = [8, 0], sizes = [8, 256], strides = [1, 1]} : vector<16x256xf32> to vector<8x256xf32>
    %76 = vector.extract_strided_slice %0 {offsets = [8, 0], sizes = [8, 256], strides = [1, 1]} : vector<16x256xf32> to vector<8x256xf32>
    %77 = vector.broadcast %66 : vector<1x256xf32> to vector<8x256xf32>
    %78 = arith.subf %75, %77 : vector<8x256xf32>
    %79 = vector.broadcast %74 : vector<1x256xf32> to vector<8x256xf32>
    %80 = arith.mulf %78, %79 : vector<8x256xf32>
    %cst_17 = arith.constant 0.000000e+00 : f32
    %81 = vector.broadcast %cst_17 : f32 to vector<8x256xf32>
    %82 = arith.maximumf %80, %81 : vector<8x256xf32>
    %83 = arith.addf %76, %82 : vector<8x256xf32>
    %c8 = arith.constant 8 : index
    %c0_18 = arith.constant 0 : index
    %84 = vector.load %arg3[%c8, %c0_18] : memref<16x256xf32, #tpu.memory_space<vmem>>, vector<8x256xf32>
    tpu.vector_store %arg3[%c8, %c0_18], %83 {strides = array<i32>} : memref<16x256xf32, #tpu.memory_space<vmem>>, vector<8x256xf32>,
    return
  }
  func.func @transform_0(%arg0: i32) -> (i32, i32) {
    %c0_i32 = arith.constant 0 : i32
    %c0_i32_0 = arith.constant 0 : i32
    return %arg0, %c0_i32 : i32, i32
  }
  func.func @transform_1(%arg0: i32) -> (i32, i32) {
    %c0_i32 = arith.constant 0 : i32
    %c0_i32_0 = arith.constant 0 : i32
    %c0_i32_1 = arith.constant 0 : i32
    return %c0_i32, %c0_i32_0 : i32, i32
  }
  func.func @transform_2(%arg0: i32) -> (i32, i32) {
    %c0_i32 = arith.constant 0 : i32
    %c0_i32_0 = arith.constant 0 : i32
    return %arg0, %c0_i32 : i32, i32
  }
}

</mosaic_0001>

<llo_original>
// kernel: tpu_custom_call.1
$region0: #{tpu_custom_call.1}
  #allocation0 [shape = 'u32[]', space=smem, size = 0x4, offset = 0x4, fixed_abs, tag = 'smem constant byte address 0x4 - core index']
  #allocation1 [shape = 'u32[144,128]{1,0:T(1,128)}', space=vmem, size = 0x12000, scoped, tag = 'internal scratch']
  %s0 = inlined_call_operand.hbm [shape: f32[16,256], index: 0, kind: input, shape index: {}]
  %s1 = inlined_call_operand.hbm [shape: bf16[768,256], index: 1, kind: input, shape index: {}]
  %s2 = inlined_call_operand.hbm [shape: f32[16,256], index: 2, kind: output, shape index: {}]
  %s3 = sld [smem:[#allocation0]]
  $region26: #{tpu_custom_call.1} parent=0
    _
  %s5 = ssub.s32 1, %s3
  %s6 = scalar_select 0, %s5, %s3
  $region1: #{tpu_custom_call.1} parent=0
    #allocation2 [shape = 'u8[16384]{0}', space=vmem, size = 0x4000, scoped, tag = 'input window, operand 0, single buffered']
    #allocation3 [shape = 's32[1]{0}', space=sflag, size = 0x4, scoped, tag = 'scoped memory for tpu_custom_call.1']
    #allocation4 [shape = 's32[1]{0}', space=sflag, size = 0x4, scoped, tag = 'scoped memory for tpu_custom_call.1']
    #allocation5 [shape = 'u8[393216]{0}', space=vmem, size = 0x60000, scoped, tag = 'input window, operand 1, single buffered']
    #allocation6 [shape = 's32[1]{0}', space=sflag, size = 0x4, scoped, tag = 'scoped memory for tpu_custom_call.1']
    #allocation7 [shape = 'u8[16384]{0}', space=vmem, size = 0x4000, scoped, tag = 'output window, operand 0, single buffered']
    %7 = vsyncpa [#allocation3], 0
    %8 = vsyncpa [#allocation6], 0
    %9 = vsyncpa [#allocation4], 0
    // Predicated region
    $region2: #{tpu_custom_call.1} parent=1 // pred_check
      _
    $region3: #{tpu_custom_call.1} parent=1 // pred_check_branch
      %11 = sbr.rel (0) target = $region5
    $region4: #{tpu_custom_call.1} parent=1 // pred_region
      %s13 = ssub.s32 512, 512
      %14 = vsyncadd [#allocation3], %s13
      %s15 = sshll.u32 [#allocation2], 4
      %s16 = int_to_ptr.vmem [resolvable:$true] %s15
      %21 = dma.hbm_to_vmem [thread:$0]  %s0, 512, %s16, [#allocation3], 256, 256, 16
    $region5: #{tpu_custom_call.1} parent=1 // pred_fallthru
      _
    // Predicated region
    $region6: #{tpu_custom_call.1} parent=1 // pred_check
      _
    $region7: #{tpu_custom_call.1} parent=1 // pred_check_branch
      %23 = sbr.rel (0) target = $region9
    $region8: #{tpu_custom_call.1} parent=1 // pred_region
      %s25 = ssub.s32 12288, 12288
      %26 = vsyncadd [#allocation6], %s25
      %s27 = sshll.u32 [#allocation5], 4
      %s28 = int_to_ptr.vmem [resolvable:$true] %s27
      %33 = dma.hbm_to_vmem [thread:$0]  %s1, 12288, %s28, [#allocation6], 128, 128, 8
    $region9: #{tpu_custom_call.1} parent=1 // pred_fallthru
      _
    // Predicated region
    $region10: #{tpu_custom_call.1} parent=1 // pred_check
      _
    $region11: #{tpu_custom_call.1} parent=1 // pred_check_branch
      %35 = sbr.rel (0) target = $region13
    $region12: #{tpu_custom_call.1} parent=1 // pred_region
      %36 = dma.done [#allocation3], 512
    $region13: #{tpu_custom_call.1} parent=1 // pred_fallthru
      _
    // Predicated region
    $region14: #{tpu_custom_call.1} parent=1 // pred_check
      _
    $region15: #{tpu_custom_call.1} parent=1 // pred_check_branch
      %38 = sbr.rel (0) target = $region17
    $region16: #{tpu_custom_call.1} parent=1 // pred_region
      %39 = dma.done [#allocation6], 12288
    $region17: #{tpu_custom_call.1} parent=1 // pred_fallthru
      _
    %v40 = vld [vmem:[#allocation2] sm:$0xff]
    %v41 = vld [vmem:[#allocation2 + $0x8] sm:$0xff]
    %v42 = vld [vmem:[#allocation2 + $0x10] sm:$0xff]
    %v43 = vld [vmem:[#allocation2 + $0x18] sm:$0xff]
    %v46 = vrot.slane %v40, 7
    %v47 = vrot.slane %v41, 7
    %vm50 = vcmask 1040384
    %v51 = vsel %vm50, 0.0, %v46
    %v52 = vsel %vm50, 0.0, %v47
    %v53 = vrot.slane %v40, 1
    %v54 = vrot.slane %v41, 1
    %vm57 = vcmask 1046528
    %v58 = vsel %vm57, %v53, 0.0
    %v59 = vsel %vm57, %v54, 0.0
    %v62 = vrot.slane %v42, 7
    %v63 = vrot.slane %v43, 7
    %v66 = vsel %vm50, 0.0, %v62
    %v67 = vsel %vm50, 0.0, %v63
    %v68 = vrot.slane %v42, 1
    %v69 = vrot.slane %v43, 1
    %v72 = vsel %vm57, %v68, 0.0
    %v73 = vsel %vm57, %v69, 0.0
    %v74 = vpack.c.bf16 %v66, %v51
    %v75 = vpack.c.bf16 %v67, %v52
    %v76 = vpack.c.bf16 %v42, %v40
    %v77 = vpack.c.bf16 %v43, %v41
    %v78 = vpack.c.bf16 %v72, %v58
    %v79 = vpack.c.bf16 %v73, %v59
    %v80 = vld [vmem:[#allocation5] sm:$0xff]
    %v81 = vld [vmem:[#allocation5 + $0x8] sm:$0xff]
    %v82 = vld [vmem:[#allocation5 + $0x10] sm:$0xff]
    %v83 = vld [vmem:[#allocation5 + $0x18] sm:$0xff]
    %v84 = vld [vmem:[#allocation5 + $0x20] sm:$0xff]
    %v85 = vld [vmem:[#allocation5 + $0x28] sm:$0xff]
    %v86 = vld [vmem:[#allocation5 + $0x30] sm:$0xff]
    %v87 = vld [vmem:[#allocation5 + $0x38] sm:$0xff]
    %v88 = vld [vmem:[#allocation5 + $0x40] sm:$0xff]
    %v89 = vld [vmem:[#allocation5 + $0x48] sm:$0xff]
    %v90 = vld [vmem:[#allocation5 + $0x50] sm:$0xff]
    %v91 = vld [vmem:[#allocation5 + $0x58] sm:$0xff]
    %v92 = vld [vmem:[#allocation5 + $0x60] sm:$0xff]
    %v93 = vld [vmem:[#allocation5 + $0x68] sm:$0xff]
    %v94 = vld [vmem:[#allocation5 + $0x70] sm:$0xff]
    %v95 = vld [vmem:[#allocation5 + $0x78] sm:$0xff]
    %v96 = vld [vmem:[#allocation5 + $0x80] sm:$0xff]
    %v97 = vld [vmem:[#allocation5 + $0x88] sm:$0xff]
    %v98 = vld [vmem:[#allocation5 + $0x90] sm:$0xff]
    %v99 = vld [vmem:[#allocation5 + $0x98] sm:$0xff]
    %v100 = vld [vmem:[#allocation5 + $0xa0] sm:$0xff]
    %v101 = vld [vmem:[#allocation5 + $0xa8] sm:$0xff]
    %v102 = vld [vmem:[#allocation5 + $0xb0] sm:$0xff]
    %v103 = vld [vmem:[#allocation5 + $0xb8] sm:$0xff]
    %v104 = vld [vmem:[#allocation5 + $0xc0] sm:$0xff]
    %v105 = vld [vmem:[#allocation5 + $0xc8] sm:$0xff]
    %v106 = vld [vmem:[#allocation5 + $0xd0] sm:$0xff]
    %v107 = vld [vmem:[#allocation5 + $0xd8] sm:$0xff]
    %v108 = vld [vmem:[#allocation5 + $0xe0] sm:$0xff]
    %v109 = vld [vmem:[#allocation5 + $0xe8] sm:$0xff]
    %v110 = vld [vmem:[#allocation5 + $0xf0] sm:$0xff]
    %v111 = vld [vmem:[#allocation5 + $0xf8] sm:$0xff]
    %v112 = vld [vmem:[#allocation5 + $0x100] sm:$0xff]
    %v113 = vld [vmem:[#allocation5 + $0x108] sm:$0xff]
    %v114 = vld [vmem:[#allocation5 + $0x110] sm:$0xff]
    %v115 = vld [vmem:[#allocation5 + $0x118] sm:$0xff]
    %v116 = vld [vmem:[#allocation5 + $0x120] sm:$0xff]
    %v117 = vld [vmem:[#allocation5 + $0x128] sm:$0xff]
    %v118 = vld [vmem:[#allocation5 + $0x130] sm:$0xff]
    %v119 = vld [vmem:[#allocation5 + $0x138] sm:$0xff]
    %v120 = vld [vmem:[#allocation5 + $0x140] sm:$0xff]
    %v121 = vld [vmem:[#allocation5 + $0x148] sm:$0xff]
    %v122 = vld [vmem:[#allocation5 + $0x150] sm:$0xff]
    %v123 = vld [vmem:[#allocation5 + $0x158] sm:$0xff]
    %v124 = vld [vmem:[#allocation5 + $0x160] sm:$0xff]
    %v125 = vld [vmem:[#allocation5 + $0x168] sm:$0xff]
    %v126 = vld [vmem:[#allocation5 + $0x170] sm:$0xff]
    %v127 = vld [vmem:[#allocation5 + $0x178] sm:$0xff]
    %v128 = vld [vmem:[#allocation5 + $0x180] sm:$0xff]
    %v129 = vld [vmem:[#allocation5 + $0x188] sm:$0xff]
    %v130 = vld [vmem:[#allocation5 + $0x190] sm:$0xff]
    %v131 = vld [vmem:[#allocation5 + $0x198] sm:$0xff]
    %v132 = vld [vmem:[#allocation5 + $0x1a0] sm:$0xff]
    %v133 = vld [vmem:[#allocation5 + $0x1a8] sm:$0xff]
    %v134 = vld [vmem:[#allocation5 + $0x1b0] sm:$0xff]
    %v135 = vld [vmem:[#allocation5 + $0x1b8] sm:$0xff]
    %v136 = vld [vmem:[#allocation5 + $0x1c0] sm:$0xff]
    %v137 = vld [vmem:[#allocation5 + $0x1c8] sm:$0xff]
    %v138 = vld [vmem:[#allocation5 + $0x1d0] sm:$0xff]
    %v139 = vld [vmem:[#allocation5 + $0x1d8] sm:$0xff]
    %v140 = vld [vmem:[#allocation5 + $0x1e0] sm:$0xff]
    %v141 = vld [vmem:[#allocation5 + $0x1e8] sm:$0xff]
    %v142 = vld [vmem:[#allocation5 + $0x1f0] sm:$0xff]
    %v143 = vld [vmem:[#allocation5 + $0x1f8] sm:$0xff]
    %v144 = vld [vmem:[#allocation5 + $0x200] sm:$0xff]
    %v145 = vld [vmem:[#allocation5 + $0x208] sm:$0xff]
    %v146 = vld [vmem:[#allocation5 + $0x210] sm:$0xff]
    %v147 = vld [vmem:[#allocation5 + $0x218] sm:$0xff]
    %v148 = vld [vmem:[#allocation5 + $0x220] sm:$0xff]
    %v149 = vld [vmem:[#allocation5 + $0x228] sm:$0xff]
    %v150 = vld [vmem:[#allocation5 + $0x230] sm:$0xff]
    %v151 = vld [vmem:[#allocation5 + $0x238] sm:$0xff]
    %v152 = vld [vmem:[#allocation5 + $0x240] sm:$0xff]
    %v153 = vld [vmem:[#allocation5 + $0x248] sm:$0xff]
    %v154 = vld [vmem:[#allocation5 + $0x250] sm:$0xff]
    %v155 = vld [vmem:[#allocation5 + $0x258] sm:$0xff]
    %v156 = vld [vmem:[#allocation5 + $0x260] sm:$0xff]
    %v157 = vld [vmem:[#allocation5 + $0x268] sm:$0xff]
    %v158 = vld [vmem:[#allocation5 + $0x270] sm:$0xff]
    %v159 = vld [vmem:[#allocation5 + $0x278] sm:$0xff]
    %v160 = vld [vmem:[#allocation5 + $0x280] sm:$0xff]
    %v161 = vld [vmem:[#allocation5 + $0x288] sm:$0xff]
    %v162 = vld [vmem:[#allocation5 + $0x290] sm:$0xff]
    %v163 = vld [vmem:[#allocation5 + $0x298] sm:$0xff]
    %v164 = vld [vmem:[#allocation5 + $0x2a0] sm:$0xff]
    %v165 = vld [vmem:[#allocation5 + $0x2a8] sm:$0xff]
    %v166 = vld [vmem:[#allocation5 + $0x2b0] sm:$0xff]
    %v167 = vld [vmem:[#allocation5 + $0x2b8] sm:$0xff]
    %v168 = vld [vmem:[#allocation5 + $0x2c0] sm:$0xff]
    %v169 = vld [vmem:[#allocation5 + $0x2c8] sm:$0xff]
    %v170 = vld [vmem:[#allocation5 + $0x2d0] sm:$0xff]
    %v171 = vld [vmem:[#allocation5 + $0x2d8] sm:$0xff]
    %v172 = vld [vmem:[#allocation5 + $0x2e0] sm:$0xff]
    %v173 = vld [vmem:[#allocation5 + $0x2e8] sm:$0xff]
    %v174 = vld [vmem:[#allocation5 + $0x2f0] sm:$0xff]
    %v175 = vld [vmem:[#allocation5 + $0x2f8] sm:$0xff]
    %v272 = vunpack.c.l.b16 %v80
    %v273 = vunpack.c.h.b16 %v80
    %v274 = vunpack.c.l.b16 %v81
    %v275 = vunpack.c.h.b16 %v81
    %v276 = vunpack.c.l.b16 %v82
    %v277 = vunpack.c.h.b16 %v82
    %v278 = vunpack.c.l.b16 %v83
    %v279 = vunpack.c.h.b16 %v83
    %v280 = vunpack.c.l.b16 %v84
    %v281 = vunpack.c.h.b16 %v84
    %v282 = vunpack.c.l.b16 %v85
    %v283 = vunpack.c.h.b16 %v85
    %v284 = vunpack.c.l.b16 %v86
    %v285 = vunpack.c.h.b16 %v86
    %v286 = vunpack.c.l.b16 %v87
    %v287 = vunpack.c.h.b16 %v87
    %v288 = vunpack.c.l.b16 %v88
    %v289 = vunpack.c.h.b16 %v88
    %v290 = vunpack.c.l.b16 %v89
    %v291 = vunpack.c.h.b16 %v89
    %v292 = vunpack.c.l.b16 %v90
    %v293 = vunpack.c.h.b16 %v90
    %v294 = vunpack.c.l.b16 %v91
    %v295 = vunpack.c.h.b16 %v91
    %v296 = vunpack.c.l.b16 %v92
    %v297 = vunpack.c.h.b16 %v92
    %v298 = vunpack.c.l.b16 %v93
    %v299 = vunpack.c.h.b16 %v93
    %v300 = vunpack.c.l.b16 %v94
    %v301 = vunpack.c.h.b16 %v94
    %v302 = vunpack.c.l.b16 %v95
    %v303 = vunpack.c.h.b16 %v95
    %v304 = vunpack.c.l.b16 %v96
    %v305 = vunpack.c.h.b16 %v96
    %v306 = vunpack.c.l.b16 %v97
    %v307 = vunpack.c.h.b16 %v97
    %v308 = vunpack.c.l.b16 %v98
    %v309 = vunpack.c.h.b16 %v98
    %v310 = vunpack.c.l.b16 %v99
    %v311 = vunpack.c.h.b16 %v99
    %v312 = vunpack.c.l.b16 %v100
    %v313 = vunpack.c.h.b16 %v100
    %v314 = vunpack.c.l.b16 %v101
    %v315 = vunpack.c.h.b16 %v101
    %v316 = vunpack.c.l.b16 %v102
    %v317 = vunpack.c.h.b16 %v102
    %v318 = vunpack.c.l.b16 %v103
    %v319 = vunpack.c.h.b16 %v103
    %v320 = vunpack.c.l.b16 %v104
    %v321 = vunpack.c.h.b16 %v104
    %v322 = vunpack.c.l.b16 %v105
    %v323 = vunpack.c.h.b16 %v105
    %v324 = vunpack.c.l.b16 %v106
    %v325 = vunpack.c.h.b16 %v106
    %v326 = vunpack.c.l.b16 %v107
    %v327 = vunpack.c.h.b16 %v107
    %v328 = vunpack.c.l.b16 %v108
    %v329 = vunpack.c.h.b16 %v108
    %v330 = vunpack.c.l.b16 %v109
    %v331 = vunpack.c.h.b16 %v109
    %v332 = vunpack.c.l.b16 %v110
    %v333 = vunpack.c.h.b16 %v110
    %v334 = vunpack.c.l.b16 %v111
    %v335 = vunpack.c.h.b16 %v111
    %v336 = vunpack.c.l.b16 %v112
    %v337 = vunpack.c.h.b16 %v112
    %v338 = vunpack.c.l.b16 %v113
    %v339 = vunpack.c.h.b16 %v113
    %v340 = vunpack.c.l.b16 %v114
    %v341 = vunpack.c.h.b16 %v114
    %v342 = vunpack.c.l.b16 %v115
    %v343 = vunpack.c.h.b16 %v115
    %v344 = vunpack.c.l.b16 %v116
    %v345 = vunpack.c.h.b16 %v116
    %v346 = vunpack.c.l.b16 %v117
    %v347 = vunpack.c.h.b16 %v117
    %v348 = vunpack.c.l.b16 %v118
    %v349 = vunpack.c.h.b16 %v118
    %v350 = vunpack.c.l.b16 %v119
    %v351 = vunpack.c.h.b16 %v119
    %v352 = vunpack.c.l.b16 %v120
    %v353 = vunpack.c.h.b16 %v120
    %v354 = vunpack.c.l.b16 %v121
    %v355 = vunpack.c.h.b16 %v121
    %v356 = vunpack.c.l.b16 %v122
    %v357 = vunpack.c.h.b16 %v122
    %v358 = vunpack.c.l.b16 %v123
    %v359 = vunpack.c.h.b16 %v123
    %v360 = vunpack.c.l.b16 %v124
    %v361 = vunpack.c.h.b16 %v124
    %v362 = vunpack.c.l.b16 %v125
    %v363 = vunpack.c.h.b16 %v125
    %v364 = vunpack.c.l.b16 %v126
    %v365 = vunpack.c.h.b16 %v126
    %v366 = vunpack.c.l.b16 %v127
    %v367 = vunpack.c.h.b16 %v127
    %v368 = vunpack.c.l.b16 %v128
    %v369 = vunpack.c.h.b16 %v128
    %v370 = vunpack.c.l.b16 %v129
    %v371 = vunpack.c.h.b16 %v129
    %v372 = vunpack.c.l.b16 %v130
    %v373 = vunpack.c.h.b16 %v130
    %v374 = vunpack.c.l.b16 %v131
    %v375 = vunpack.c.h.b16 %v131
    %v376 = vunpack.c.l.b16 %v132
    %v377 = vunpack.c.h.b16 %v132
    %v378 = vunpack.c.l.b16 %v133
    %v379 = vunpack.c.h.b16 %v133
    %v380 = vunpack.c.l.b16 %v134
    %v381 = vunpack.c.h.b16 %v134
    %v382 = vunpack.c.l.b16 %v135
    %v383 = vunpack.c.h.b16 %v135
    %v384 = vunpack.c.l.b16 %v136
    %v385 = vunpack.c.h.b16 %v136
    %v386 = vunpack.c.l.b16 %v137
    %v387 = vunpack.c.h.b16 %v137
    %v388 = vunpack.c.l.b16 %v138
    %v389 = vunpack.c.h.b16 %v138
    %v390 = vunpack.c.l.b16 %v139
    %v391 = vunpack.c.h.b16 %v139
    %v392 = vunpack.c.l.b16 %v140
    %v393 = vunpack.c.h.b16 %v140
    %v394 = vunpack.c.l.b16 %v141
    %v395 = vunpack.c.h.b16 %v141
    %v396 = vunpack.c.l.b16 %v142
    %v397 = vunpack.c.h.b16 %v142
    %v398 = vunpack.c.l.b16 %v143
    %v399 = vunpack.c.h.b16 %v143
    %v400 = vunpack.c.l.b16 %v144
    %v401 = vunpack.c.h.b16 %v144
    %v402 = vunpack.c.l.b16 %v145
    %v403 = vunpack.c.h.b16 %v145
    %v404 = vunpack.c.l.b16 %v146
    %v405 = vunpack.c.h.b16 %v146
    %v406 = vunpack.c.l.b16 %v147
    %v407 = vunpack.c.h.b16 %v147
    %v408 = vunpack.c.l.b16 %v148
    %v409 = vunpack.c.h.b16 %v148
    %v410 = vunpack.c.l.b16 %v149
    %v411 = vunpack.c.h.b16 %v149
    %v412 = vunpack.c.l.b16 %v150
    %v413 = vunpack.c.h.b16 %v150
    %v414 = vunpack.c.l.b16 %v151
    %v415 = vunpack.c.h.b16 %v151
    %v416 = vunpack.c.l.b16 %v152
    %v417 = vunpack.c.h.b16 %v152
    %v418 = vunpack.c.l.b16 %v153
    %v419 = vunpack.c.h.b16 %v153
    %v420 = vunpack.c.l.b16 %v154
    %v421 = vunpack.c.h.b16 %v154
    %v422 = vunpack.c.l.b16 %v155
    %v423 = vunpack.c.h.b16 %v155
    %v424 = vunpack.c.l.b16 %v156
    %v425 = vunpack.c.h.b16 %v156
    %v426 = vunpack.c.l.b16 %v157
    %v427 = vunpack.c.h.b16 %v157
    %v428 = vunpack.c.l.b16 %v158
    %v429 = vunpack.c.h.b16 %v158
    %v430 = vunpack.c.l.b16 %v159
    %v431 = vunpack.c.h.b16 %v159
    %v432 = vunpack.c.l.b16 %v160
    %v433 = vunpack.c.h.b16 %v160
    %v434 = vunpack.c.l.b16 %v161
    %v435 = vunpack.c.h.b16 %v161
    %v436 = vunpack.c.l.b16 %v162
    %v437 = vunpack.c.h.b16 %v162
    %v438 = vunpack.c.l.b16 %v163
    %v439 = vunpack.c.h.b16 %v163
    %v440 = vunpack.c.l.b16 %v164
    %v441 = vunpack.c.h.b16 %v164
    %v442 = vunpack.c.l.b16 %v165
    %v443 = vunpack.c.h.b16 %v165
    %v444 = vunpack.c.l.b16 %v166
    %v445 = vunpack.c.h.b16 %v166
    %v446 = vunpack.c.l.b16 %v167
    %v447 = vunpack.c.h.b16 %v167
    %v448 = vunpack.c.l.b16 %v168
    %v449 = vunpack.c.h.b16 %v168
    %v450 = vunpack.c.l.b16 %v169
    %v451 = vunpack.c.h.b16 %v169
    %v452 = vunpack.c.l.b16 %v170
    %v453 = vunpack.c.h.b16 %v170
    %v454 = vunpack.c.l.b16 %v171
    %v455 = vunpack.c.h.b16 %v171
    %v456 = vunpack.c.l.b16 %v172
    %v457 = vunpack.c.h.b16 %v172
    %v458 = vunpack.c.l.b16 %v173
    %v459 = vunpack.c.h.b16 %v173
    %v460 = vunpack.c.l.b16 %v174
    %v461 = vunpack.c.h.b16 %v174
    %v462 = vunpack.c.l.b16 %v175
    %v463 = vunpack.c.h.b16 %v175
    %v464 = vpack.c.b16 %v274, %v272
    %v465 = vpack.c.b16 %v275, %v273
    %v466 = vpack.c.b16 %v278, %v276
    %v467 = vpack.c.b16 %v279, %v277
    %v468 = vpack.c.b16 %v282, %v280
    %v469 = vpack.c.b16 %v283, %v281
    %v470 = vpack.c.b16 %v286, %v284
    %v471 = vpack.c.b16 %v287, %v285
    %v472 = vpack.c.b16 %v290, %v288
    %v473 = vpack.c.b16 %v291, %v289
    %v474 = vpack.c.b16 %v294, %v292
    %v475 = vpack.c.b16 %v295, %v293
    %v476 = vpack.c.b16 %v298, %v296
    %v477 = vpack.c.b16 %v299, %v297
    %v478 = vpack.c.b16 %v302, %v300
    %v479 = vpack.c.b16 %v303, %v301
    %v480 = vpack.c.b16 %v306, %v304
    %v481 = vpack.c.b16 %v307, %v305
    %v482 = vpack.c.b16 %v310, %v308
    %v483 = vpack.c.b16 %v311, %v309
    %v484 = vpack.c.b16 %v314, %v312
    %v485 = vpack.c.b16 %v315, %v313
    %v486 = vpack.c.b16 %v318, %v316
    %v487 = vpack.c.b16 %v319, %v317
    %v488 = vpack.c.b16 %v322, %v320
    %v489 = vpack.c.b16 %v323, %v321
    %v490 = vpack.c.b16 %v326, %v324
    %v491 = vpack.c.b16 %v327, %v325
    %v492 = vpack.c.b16 %v330, %v328
    %v493 = vpack.c.b16 %v331, %v329
    %v494 = vpack.c.b16 %v334, %v332
    %v495 = vpack.c.b16 %v335, %v333
    %v496 = vpack.c.b16 %v338, %v336
    %v497 = vpack.c.b16 %v339, %v337
    %v498 = vpack.c.b16 %v342, %v340
    %v499 = vpack.c.b16 %v343, %v341
    %v500 = vpack.c.b16 %v346, %v344
    %v501 = vpack.c.b16 %v347, %v345
    %v502 = vpack.c.b16 %v350, %v348
    %v503 = vpack.c.b16 %v351, %v349
    %v504 = vpack.c.b16 %v354, %v352
    %v505 = vpack.c.b16 %v355, %v353
    %v506 = vpack.c.b16 %v358, %v356
    %v507 = vpack.c.b16 %v359, %v357
    %v508 = vpack.c.b16 %v362, %v360
    %v509 = vpack.c.b16 %v363, %v361
    %v510 = vpack.c.b16 %v366, %v364
    %v511 = vpack.c.b16 %v367, %v365
    %v512 = vpack.c.b16 %v370, %v368
    %v513 = vpack.c.b16 %v371, %v369
    %v514 = vpack.c.b16 %v374, %v372
    %v515 = vpack.c.b16 %v375, %v373
    %v516 = vpack.c.b16 %v378, %v376
    %v517 = vpack.c.b16 %v379, %v377
    %v518 = vpack.c.b16 %v382, %v380
    %v519 = vpack.c.b16 %v383, %v381
    %v520 = vpack.c.b16 %v386, %v384
    %v521 = vpack.c.b16 %v387, %v385
    %v522 = vpack.c.b16 %v390, %v388
    %v523 = vpack.c.b16 %v391, %v389
    %v524 = vpack.c.b16 %v394, %v392
    %v525 = vpack.c.b16 %v395, %v393
    %v526 = vpack.c.b16 %v398, %v396
    %v527 = vpack.c.b16 %v399, %v397
    %v528 = vpack.c.b16 %v402, %v400
    %v529 = vpack.c.b16 %v403, %v401
    %v530 = vpack.c.b16 %v406, %v404
    %v531 = vpack.c.b16 %v407, %v405
    %v532 = vpack.c.b16 %v410, %v408
    %v533 = vpack.c.b16 %v411, %v409
    %v534 = vpack.c.b16 %v414, %v412
    %v535 = vpack.c.b16 %v415, %v413
    %v536 = vpack.c.b16 %v418, %v416
    %v537 = vpack.c.b16 %v419, %v417
    %v538 = vpack.c.b16 %v422, %v420
    %v539 = vpack.c.b16 %v423, %v421
    %v540 = vpack.c.b16 %v426, %v424
    %v541 = vpack.c.b16 %v427, %v425
    %v542 = vpack.c.b16 %v430, %v428
    %v543 = vpack.c.b16 %v431, %v429
    %v544 = vpack.c.b16 %v434, %v432
    %v545 = vpack.c.b16 %v435, %v433
    %v546 = vpack.c.b16 %v438, %v436
    %v547 = vpack.c.b16 %v439, %v437
    %v548 = vpack.c.b16 %v442, %v440
    %v549 = vpack.c.b16 %v443, %v441
    %v550 = vpack.c.b16 %v446, %v444
    %v551 = vpack.c.b16 %v447, %v445
    %v552 = vpack.c.b16 %v450, %v448
    %v553 = vpack.c.b16 %v451, %v449
    %v554 = vpack.c.b16 %v454, %v452
    %v555 = vpack.c.b16 %v455, %v453
    %v556 = vpack.c.b16 %v458, %v456
    %v557 = vpack.c.b16 %v459, %v457
    %v558 = vpack.c.b16 %v462, %v460
    %v559 = vpack.c.b16 %v463, %v461
    %656 = vmatprep.subr.bf16.mxu0 %v465
    %657 = vmatpush1.bf16.msra.mxu0 %v464
    %658 = vmatprep.subr.bf16.mxu0 %v467
    %659 = vmatpush1.bf16.msra.mxu0 %v466
    %660 = vmatprep.subr.bf16.mxu0 %v469
    %661 = vmatpush1.bf16.msra.mxu0 %v468
    %662 = vmatprep.subr.bf16.mxu0 %v471
    %663 = vmatpush1.bf16.msra.mxu0 %v470
    %664 = vmatprep.subr.bf16.mxu0 %v473
    %665 = vmatpush1.bf16.msra.mxu0 %v472
    %666 = vmatprep.subr.bf16.mxu0 %v475
    %667 = vmatpush1.bf16.msra.mxu0 %v474
    %668 = vmatprep.subr.bf16.mxu0 %v477
    %669 = vmatpush1.bf16.msra.mxu0 %v476
    %670 = vmatprep.subr.bf16.mxu0 %v479
    %671 = vmatpush1.bf16.msra.mxu0 %v478
    %672 = vmatprep.subr.bf16.mxu0 %v481
    %673 = vmatpush1.bf16.msra.mxu0 %v480
    %674 = vmatprep.subr.bf16.mxu0 %v483
    %675 = vmatpush1.bf16.msra.mxu0 %v482
    %676 = vmatprep.subr.bf16.mxu0 %v485
    %677 = vmatpush1.bf16.msra.mxu0 %v484
    %678 = vmatprep.subr.bf16.mxu0 %v487
    %679 = vmatpush1.bf16.msra.mxu0 %v486
    %680 = vmatprep.subr.bf16.mxu0 %v489
    %681 = vmatpush1.bf16.msra.mxu0 %v488
    %682 = vmatprep.subr.bf16.mxu0 %v491
    %683 = vmatpush1.bf16.msra.mxu0 %v490
    %684 = vmatprep.subr.bf16.mxu0 %v493
    %685 = vmatpush1.bf16.msra.mxu0 %v492
    %686 = vmatprep.subr.bf16.mxu0 %v495
    %687 = vmatpush1.bf16.msra.mxu0 %v494
    %688 = vmatprep.mubr.bf16.mxu0 %v75
    %689 = vmatmul.mubr.bf16.gmra.mrb[0].mxu0 %v74
    %v690 = vpop.f32.mrb[0].mxu0
    %v691 = vadd.f32 0.0, %v690
    %v692 = vpop.f32.mrb[0].mxu0
    %v693 = vadd.f32 0.0, %v692
    %v694 = vpop.f32.mrb[0].mxu0
    %v695 = vadd.f32 0.0, %v694
    %v696 = vpop.f32.mrb[0].mxu0
    %v697 = vadd.f32 0.0, %v696
    %698 = vdwg.mxu0
    %699 = vmatprep.subr.bf16.mxu0 %v497
    %700 = vmatpush1.bf16.msra.mxu0 %v496
    %701 = vmatprep.subr.bf16.mxu0 %v499
    %702 = vmatpush1.bf16.msra.mxu0 %v498
    %703 = vmatprep.subr.bf16.mxu0 %v501
    %704 = vmatpush1.bf16.msra.mxu0 %v500
    %705 = vmatprep.subr.bf16.mxu0 %v503
    %706 = vmatpush1.bf16.msra.mxu0 %v502
    %707 = vmatprep.subr.bf16.mxu0 %v505
    %708 = vmatpush1.bf16.msra.mxu0 %v504
    %709 = vmatprep.subr.bf16.mxu0 %v507
    %710 = vmatpush1.bf16.msra.mxu0 %v506
    %711 = vmatprep.subr.bf16.mxu0 %v509
    %712 = vmatpush1.bf16.msra.mxu0 %v508
    %713 = vmatprep.subr.bf16.mxu0 %v511
    %714 = vmatpush1.bf16.msra.mxu0 %v510
    %715 = vmatprep.subr.bf16.mxu0 %v513
    %716 = vmatpush1.bf16.msra.mxu0 %v512
    %717 = vmatprep.subr.bf16.mxu0 %v515
    %718 = vmatpush1.bf16.msra.mxu0 %v514
    %719 = vmatprep.subr.bf16.mxu0 %v517
    %720 = vmatpush1.bf16.msra.mxu0 %v516
    %721 = vmatprep.subr.bf16.mxu0 %v519
    %722 = vmatpush1.bf16.msra.mxu0 %v518
    %723 = vmatprep.subr.bf16.mxu0 %v521
    %724 = vmatpush1.bf16.msra.mxu0 %v520
    %725 = vmatprep.subr.bf16.mxu0 %v523
    %726 = vmatpush1.bf16.msra.mxu0 %v522
    %727 = vmatprep.subr.bf16.mxu0 %v525
    %728 = vmatpush1.bf16.msra.mxu0 %v524
    %729 = vmatprep.subr.bf16.mxu0 %v527
    %730 = vmatpush1.bf16.msra.mxu0 %v526
    %731 = vmatprep.mubr.bf16.mxu0 %v77
    %732 = vmatmul.mubr.bf16.gmra.mrb[0].mxu0 %v76
    %v733 = vpop.f32.mrb[0].mxu0
    %v734 = vadd.f32 %v691, %v733
    %v735 = vpop.f32.mrb[0].mxu0
    %v736 = vadd.f32 %v693, %v735
    %v737 = vpop.f32.mrb[0].mxu0
    %v738 = vadd.f32 %v695, %v737
    %v739 = vpop.f32.mrb[0].mxu0
    %v740 = vadd.f32 %v697, %v739
    %741 = vdwg.mxu0
    %742 = vmatprep.subr.bf16.mxu0 %v529
    %743 = vmatpush1.bf16.msra.mxu0 %v528
    %744 = vmatprep.subr.bf16.mxu0 %v531
    %745 = vmatpush1.bf16.msra.mxu0 %v530
    %746 = vmatprep.subr.bf16.mxu0 %v533
    %747 = vmatpush1.bf16.msra.mxu0 %v532
    %748 = vmatprep.subr.bf16.mxu0 %v535
    %749 = vmatpush1.bf16.msra.mxu0 %v534
    %750 = vmatprep.subr.bf16.mxu0 %v537
    %751 = vmatpush1.bf16.msra.mxu0 %v536
    %752 = vmatprep.subr.bf16.mxu0 %v539
    %753 = vmatpush1.bf16.msra.mxu0 %v538
    %754 = vmatprep.subr.bf16.mxu0 %v541
    %755 = vmatpush1.bf16.msra.mxu0 %v540
    %756 = vmatprep.subr.bf16.mxu0 %v543
    %757 = vmatpush1.bf16.msra.mxu0 %v542
    %758 = vmatprep.subr.bf16.mxu0 %v545
    %759 = vmatpush1.bf16.msra.mxu0 %v544
    %760 = vmatprep.subr.bf16.mxu0 %v547
    %761 = vmatpush1.bf16.msra.mxu0 %v546
    %762 = vmatprep.subr.bf16.mxu0 %v549
    %763 = vmatpush1.bf16.msra.mxu0 %v548
    %764 = vmatprep.subr.bf16.mxu0 %v551
    %765 = vmatpush1.bf16.msra.mxu0 %v550
    %766 = vmatprep.subr.bf16.mxu0 %v553
    %767 = vmatpush1.bf16.msra.mxu0 %v552
    %768 = vmatprep.subr.bf16.mxu0 %v555
    %769 = vmatpush1.bf16.msra.mxu0 %v554
    %770 = vmatprep.subr.bf16.mxu0 %v557
    %771 = vmatpush1.bf16.msra.mxu0 %v556
    %772 = vmatprep.subr.bf16.mxu0 %v559
    %773 = vmatpush1.bf16.msra.mxu0 %v558
    %774 = vmatprep.mubr.bf16.mxu0 %v79
    %775 = vmatmul.mubr.bf16.gmra.mrb[0].mxu0 %v78
    %v776 = vpop.f32.mrb[0].mxu0
    %v777 = vadd.f32 %v734, %v776
    %v778 = vpop.f32.mrb[0].mxu0
    %v779 = vadd.f32 %v736, %v778
    %v780 = vpop.f32.mrb[0].mxu0
    %v781 = vadd.f32 %v738, %v780
    %v782 = vpop.f32.mrb[0].mxu0
    %v783 = vadd.f32 %v740, %v782
    %784 = vdwg.mxu0
    %v785 = vrot.slane %v777, 4
    %v786 = vadd.f32 %v777, %v785
    %v787 = vrot.slane %v786, 2
    %v788 = vadd.f32 %v786, %v787
    %v789 = vrot.slane %v788, 1
    %v790 = vadd.f32 %v788, %v789
    %v791 = vrot.slane %v779, 4
    %v792 = vadd.f32 %v779, %v791
    %v793 = vrot.slane %v792, 2
    %v794 = vadd.f32 %v792, %v793
    %v795 = vrot.slane %v794, 1
    %v796 = vadd.f32 %v794, %v795
    %v797 = vmul.f32 %v777, %v777
    %v798 = vmul.f32 %v779, %v779
    %v799 = vrot.slane %v797, 4
    %v800 = vadd.f32 %v797, %v799
    %v801 = vrot.slane %v800, 2
    %v802 = vadd.f32 %v800, %v801
    %v803 = vrot.slane %v802, 1
    %v804 = vadd.f32 %v802, %v803
    %v805 = vrot.slane %v798, 4
    %v806 = vadd.f32 %v798, %v805
    %v807 = vrot.slane %v806, 2
    %v808 = vadd.f32 %v806, %v807
    %v809 = vrot.slane %v808, 1
    %v810 = vadd.f32 %v808, %v809
    %v811 = vrot.slane %v781, 4
    %v812 = vadd.f32 %v781, %v811
    %v813 = vrot.slane %v812, 2
    %v814 = vadd.f32 %v812, %v813
    %v815 = vrot.slane %v814, 1
    %v816 = vadd.f32 %v814, %v815
    %v817 = vrot.slane %v783, 4
    %v818 = vadd.f32 %v783, %v817
    %v819 = vrot.slane %v818, 2
    %v820 = vadd.f32 %v818, %v819
    %v821 = vrot.slane %v820, 1
    %v822 = vadd.f32 %v820, %v821
    %v823 = vmul.f32 %v781, %v781
    %v824 = vmul.f32 %v783, %v783
    %v825 = vrot.slane %v823, 4
    %v826 = vadd.f32 %v823, %v825
    %v827 = vrot.slane %v826, 2
    %v828 = vadd.f32 %v826, %v827
    %v829 = vrot.slane %v828, 1
    %v830 = vadd.f32 %v828, %v829
    %v831 = vrot.slane %v824, 4
    %v832 = vadd.f32 %v824, %v831
    %v833 = vrot.slane %v832, 2
    %v834 = vadd.f32 %v832, %v833
    %v835 = vrot.slane %v834, 1
    %v836 = vadd.f32 %v834, %v835
    %v837 = vsel %vm50, %v790, %v804
    %v838 = vsel %vm50, %v796, %v810
    %vm839 = vcmask 1041408
    %v840 = vsel %vm839, %v837, %v816
    %v841 = vsel %vm839, %v838, %v822
    %vm842 = vcmask 1042432
    %v843 = vsel %vm842, %v840, %v830
    %v844 = vsel %vm842, %v841, %v836
    %845 = vrot.lane.b32.xlu0 %v843, 4
    %v846 = vpop.permute.xlu0 %845
    %847 = vrot.lane.b32.xlu0 %v844, 4
    %v848 = vpop.permute.xlu0 %847
    %v849 = vlaneseq
    %v850 = vand.u32 %v849, 127
    %vm851 = vcmp.lt.s32.totalorder %v850, 4
    %v852 = vsel %vm851, %v846, %v848
    %v853 = vsel %vm851, %v848, %v846
    %v854 = vadd.f32 %v843, %v853
    %v855 = vadd.f32 %v844, %v852
    %856 = vrot.lane.b32.xlu0 %v854, 8
    %v857 = vpop.permute.xlu0 %856
    %858 = vrot.lane.b32.xlu0 %v855, 8
    %v859 = vpop.permute.xlu0 %858
    %vm860 = vcmp.lt.s32.totalorder %v850, 8
    %v861 = vsel %vm860, %v857, %v859
    %v862 = vsel %vm860, %v859, %v857
    %v863 = vadd.f32 %v854, %v862
    %v864 = vadd.f32 %v855, %v861
    %865 = vrot.lane.b32.xlu0 %v863, 16
    %v866 = vpop.permute.xlu0 %865
    %867 = vrot.lane.b32.xlu0 %v864, 16
    %v868 = vpop.permute.xlu0 %867
    %vm869 = vcmp.lt.s32.totalorder %v850, 16
    %v870 = vsel %vm869, %v866, %v868
    %v871 = vsel %vm869, %v868, %v866
    %v872 = vadd.f32 %v863, %v871
    %v873 = vadd.f32 %v864, %v870
    %874 = vrot.lane.b32.xlu0 %v872, 32
    %v875 = vpop.permute.xlu0 %874
    %876 = vrot.lane.b32.xlu0 %v873, 32
    %v877 = vpop.permute.xlu0 %876
    %vm878 = vcmp.lt.s32.totalorder %v850, 32
    %v879 = vsel %vm878, %v875, %v877
    %v880 = vsel %vm878, %v877, %v875
    %v881 = vadd.f32 %v872, %v880
    %v882 = vadd.f32 %v873, %v879
    %883 = vrot.lane.b32.xlu0 %v881, 64
    %v884 = vpop.permute.xlu0 %883
    %885 = vrot.lane.b32.xlu0 %v882, 64
    %v886 = vpop.permute.xlu0 %885
    %vm887 = vcmp.lt.s32.totalorder %v850, 64
    %v888 = vsel %vm887, %v884, %v886
    %v889 = vsel %vm887, %v886, %v884
    %v890 = vadd.f32 %v881, %v889
    %v891 = vadd.f32 %v882, %v888
    %v892 = vadd.f32 %v890, %v891
    %v893 = vmul.f32 %v892, 0.001953125
    %v894 = vmul.f32 %v893, %v893
    %v896 = vrot.slane %v894, 7
    %v898 = vsub.f32 %v893, %v896
    %v899 = vadd.f32 %v898, 1e-05
    %v900 = vrsqrt.pop %v899
    %v901 = vlaneseq
    %v902 = vshrl.u32 %v901, 7
    %v903 = vsub.s32 0, %v902
    %v904 = vrot.slane %v893, %v903
    %v905 = vsub.f32 %v777, %v904
    %v906 = vsub.f32 %v779, %v904
    %v907 = vlaneseq
    %v908 = vshrl.u32 %v907, 7
    %v909 = vsub.s32 1, %v908
    %v910 = vrot.slane %v900, %v909
    %v911 = vmul.f32 %v905, %v910
    %v912 = vmul.f32 %v906, %v910
    %v913 = vmax.f32 %v911, 0.0
    %v914 = vmax.f32 %v912, 0.0
    %v915 = vadd.f32 %v40, %v913
    %v916 = vadd.f32 %v41, %v914
    %917 = vst [vmem:[#allocation7] sm:$0xff] %v915
    %918 = vst [vmem:[#allocation7 + $0x8] sm:$0xff] %v916
    %v919 = vlaneseq
    %v920 = vshrl.u32 %v919, 7
    %v921 = vsub.s32 2, %v920
    %v922 = vrot.slane %v893, %v921
    %v923 = vsub.f32 %v781, %v922
    %v924 = vsub.f32 %v783, %v922
    %v925 = vlaneseq
    %v926 = vshrl.u32 %v925, 7
    %v927 = vsub.s32 3, %v926
    %v928 = vrot.slane %v900, %v927
    %v929 = vmul.f32 %v923, %v928
    %v930 = vmul.f32 %v924, %v928
    %v931 = vmax.f32 %v929, 0.0
    %v932 = vmax.f32 %v930, 0.0
    %v933 = vadd.f32 %v42, %v931
    %v934 = vadd.f32 %v43, %v932
    %935 = vst [vmem:[#allocation7 + $0x10] sm:$0xff] %v933
    %936 = vst [vmem:[#allocation7 + $0x18] sm:$0xff] %v934
    // Predicated region
    $region18: #{tpu_custom_call.1} parent=1 // pred_check
      _
    $region19: #{tpu_custom_call.1} parent=1 // pred_check_branch
      %938 = sbr.rel (0) target = $region21
    $region20: #{tpu_custom_call.1} parent=1 // pred_region
      %s940 = ssub.s32 512, 512
      %941 = vsyncadd [#allocation4], %s940
      %s942 = sshll.u32 [#allocation7], 4
      %s943 = int_to_ptr.vmem [resolvable:$true] %s942
      %948 = dma.vmem_to_hbm [thread:$0]  %s943, 512, %s2, [#allocation4], 256, 256, 16
    $region21: #{tpu_custom_call.1} parent=1 // pred_fallthru
      _
    // Predicated region
    $region22: #{tpu_custom_call.1} parent=1 // pred_check
      _
    $region23: #{tpu_custom_call.1} parent=1 // pred_check_branch
      %950 = sbr.rel (0) target = $region25
    $region24: #{tpu_custom_call.1} parent=1 // pred_region
      %951 = dma.done [#allocation4], 512
    $region25: #{tpu_custom_call.1} parent=1 // pred_fallthru
      _
    %952 = vsyncpa [#allocation3], 1
    %953 = vsyncpa [#allocation6], 1
    %954 = vsyncpa [#allocation4], 1

</llo_original>
